<compile_context>
chip_gen: v7x
topology: tpu7x:2x2x1
jax: 0.10.0
libtpu: 0.0.40
codegen_flags: <defaults>
</compile_context>

<pallas_src>
import functools

import jax
import jax.numpy as jnp
from jax.experimental import pallas as pl
from jax.experimental.pallas import tpu as pltpu


def _round_up(x, m):
    return (x + m - 1) // m * m


def _choose_hidden_tile(hidden, tnk_max=512):
    """One tile size used for both the N and K splits of the hidden dim."""
    for tnk in (512, 256, 128):
        if tnk > tnk_max:
            continue
        h_pad = _round_up(hidden, tnk)
        if (h_pad - hidden) * 8 <= hidden:  # accept <= 12.5% lane-padding waste
            return tnk, h_pad
    return 128, _round_up(hidden, 128)


def _choose_m_tile(m, tm_max=512):
    """Largest M tile with bounded row-padding waste; m_pad % tm == 0."""
    m8 = _round_up(m, 8)
    if m8 <= tm_max:
        return m8, m8
    best_tm, best_waste = 8, m8 - m
    for tm in (512, 384, 256, 192, 128, 64, 32, 16, 8):
        if tm > tm_max:
            continue
        waste = _round_up(m, tm) - m
        if waste * 16 <= m:  # <= 6.25% waste -> take the biggest such tile
            return tm, _round_up(m, tm)
        if waste < best_waste:
            best_tm, best_waste = tm, waste
    return best_tm, _round_up(m, best_tm)


def _vmem_limit_bytes():
    # ~48 MiB on v7x (64 MiB physical), 64 MiB on v5e/v6e (128 MiB physical).
    cap = 64 * 1024 * 1024
    try:
        info = pltpu.get_tpu_info()
        cap = int(getattr(info, "vmem_capacity_bytes", cap))
    except Exception:
        pass
    return min(64 * 1024 * 1024, cap * 3 // 4)


def _residual_linear_kernel(x_ref, w_ref, b_ref, o_ref):
    # x_ref: (TM, TK) bf16  -- matmul LHS; doubles as the residual tile at k == j
    # w_ref: (TK, TN) bf16   b_ref: (1, TN) f32
    # o_ref: (TM, TN) f32    -- resident across the K axis (accumulator)
    j = pl.program_id(1)
    k = pl.program_id(2)

    @pl.when(k == 0)
    def _():
        o_ref[...] = jnp.zeros_like(o_ref)

    o_ref[...] += jnp.dot(x_ref[...], w_ref[...],
                          preferred_element_type=jnp.float32)

    # Residual add: TN == TK and hidden is tiled identically on N and K, so the
    # residual tile of output column-block j is exactly the LHS tile at k == j.
    @pl.when(k == j)
    def _():
        o_ref[...] += x_ref[...].astype(jnp.float32)

    @pl.when(k == pl.num_programs(2) - 1)
    def _():
        o_ref[...] += b_ref[...]


def prepare_residual_linear_params(w, b, *, tnk_max=512):
    """Pad + cast the Linear params once (hoisted out of the per-call path)."""
    hidden = w.shape[0]
    assert w.shape == (hidden, hidden) and b.shape == (hidden,)
    tnk, h_pad = _choose_hidden_tile(hidden, tnk_max)
    if h_pad != hidden:
        w = jnp.pad(w, ((0, h_pad - hidden), (0, h_pad - hidden)))
        b = jnp.pad(b, (0, h_pad - hidden))
    w_bf16 = w.astype(jnp.bfloat16)
    b_f32 = b.astype(jnp.float32).reshape(1, h_pad)
    return w_bf16, b_f32, tnk


@functools.partial(jax.jit, static_argnames=("tnk", "tm_max"))
def residual_linear(x, w_bf16, b_f32, *, tnk, tm_max=512):
    """fn(x) + x with fn(x) = x @ W + b (W/b pre-padded & bf16-cast)."""
    batch, seq, hidden = x.shape
    h_pad = w_bf16.shape[0]
    m = batch * seq
    x2 = x.reshape(m, hidden)

    tm, m_pad = _choose_m_tile(m, tm_max)
    grid_j = h_pad // tnk
    # v7x has 2 TensorCores: make sure the "parallel" axes give >= 2 blocks.
    if grid_j * (m_pad // tm) < 2 and tm % 16 == 0:
        tm //= 2
    grid = (m_pad // tm, grid_j, h_pad // tnk)

    if (m_pad, h_pad) != (m, hidden):
        x2 = jnp.pad(x2, ((0, m_pad - m), (0, h_pad - hidden)))
    x2 = x2.astype(jnp.bfloat16)

    out2 = pl.pallas_call(
        _residual_linear_kernel,
        out_shape=jax.ShapeDtypeStruct((m_pad, h_pad), jnp.float32),
        grid_spec=pltpu.PrefetchScalarGridSpec(
            num_scalar_prefetch=0,
            grid=grid,
            in_specs=[
                # x as matmul LHS (and residual tile when k == j).
                pl.BlockSpec((tm, tnk), lambda i, j, k: (i, k)),
                # Weights, tiled over (K, N); re-used across the row axis.
                pl.BlockSpec((tnk, tnk), lambda i, j, k: (k, j)),
                # Bias, only the current N tile resident.
                pl.BlockSpec((1, tnk), lambda i, j, k: (0, j)),
            ],
            out_specs=pl.BlockSpec((tm, tnk), lambda i, j, k: (i, j)),
        ),
        compiler_params=pltpu.CompilerParams(
            dimension_semantics=("parallel", "parallel", "arbitrary"),
            vmem_limit_bytes=_vmem_limit_bytes(),
        ),
    )(x2, w_bf16, b_f32)

    out2 = out2[:m, :hidden]
    return out2.reshape(batch, seq, hidden).astype(x.dtype)


def _run_case(x, w, b):
    w_p, b_p, tnk = prepare_residual_linear_params(w, b)
    out = jax.block_until_ready(residual_linear(x, w_p, b_p, tnk=tnk))
    assert out.shape == x.shape

    # Tight check vs. a reference matching the kernel numerics
    # (bf16 operands, f32 accumulation).
    xb = x.astype(jnp.bfloat16).astype(jnp.float32)
    wb = w.astype(jnp.bfloat16).astype(jnp.float32)
    ref_bf16 = jnp.einsum("bsh,hk->bsk", xb, wb,
                          precision=jax.lax.Precision.HIGHEST) + b + xb
    assert jnp.allclose(out, ref_bf16, atol=1e-4, rtol=1e-4), \
        "mismatch vs bf16-equivalent reference"

    # Loose check vs. the pure f32 module semantics fn(x) + x.
    ref_f32 = jnp.einsum("bsh,hk->bsk", x, w,
                         precision=jax.lax.Precision.HIGHEST) + b + x
    assert jnp.allclose(out, ref_f32, atol=1e-1, rtol=5e-2), \
        "mismatch vs f32 reference"


if __name__ == "__main__":
    key = jax.random.PRNGKey(0)
    kx, kw, kb, kx2, kw2, kb2 = jax.random.split(key, 6)

    # Small shape consistent with the module (Residual over a hidden->hidden fn).
    batch, seq, hidden = 2, 8, 32
    x = jax.random.normal(kx, (batch, seq, hidden), dtype=jnp.float32)
    w = jax.random.normal(kw, (hidden, hidden), dtype=jnp.float32) / hidden ** 0.5
    b = jax.random.normal(kb, (hidden,), dtype=jnp.float32) * 0.01
    _run_case(x, w, b)

    # Larger shape exercising multi-block M, row padding, and the 512 N/K tile.
    batch2, seq2, hidden2 = 2, 150, 512
    x2 = jax.random.normal(kx2, (batch2, seq2, hidden2), dtype=jnp.float32)
    w2 = jax.random.normal(kw2, (hidden2, hidden2), dtype=jnp.float32) / hidden2 ** 0.5
    b2 = jax.random.normal(kb2, (hidden2,), dtype=jnp.float32) * 0.01
    _run_case(x2, w2, b2)

    # TODO(synk): Residual wraps an arbitrary fn; only the Linear instantiation
    # is fused here — other fns would need their own kernels.
    print("KERNEL_OK")
</pallas_src>

<mosaic_0001>
module attributes {stable_mosaic.version = 11 : i64} {
  func.func @_residual_linear_kernel(%arg0: i32, %arg1: i32, %arg2: i32, %arg3: memref<8x128xbf16, #tpu.memory_space<vmem>>, %arg4: memref<128x128xbf16, #tpu.memory_space<vmem>>, %arg5: memref<1x128xf32, #tpu.memory_space<vmem>>, %arg6: memref<8x128xf32, #tpu.memory_space<vmem>>) attributes {dimension_semantics = [#tpu.dimension_semantics<parallel>, #tpu.dimension_semantics<parallel>, #tpu.dimension_semantics<arbitrary>], iteration_bounds = array<i64: 2, 1, 1>, scalar_prefetch = 0 : i64, scratch_operands = 0 : i64, tpu.core_type = #tpu.core_type<tc>, window_params = [{transform_indices = @transform_0, window_bounds = array<i64: 8, 128>}, {transform_indices = @transform_1, window_bounds = array<i64: 128, 128>}, {transform_indices = @transform_2, window_bounds = array<i64: 1, 128>}, {transform_indices = @transform_3, window_bounds = array<i64: 8, 128>}]} {
    %c0_i32 = arith.constant 0 : i32
    %0 = arith.cmpi eq, %arg2, %c0_i32 : i32
    %1 = arith.extui %0 : i1 to i32
    %c0_i32_0 = arith.constant 0 : i32
    %2 = arith.cmpi ne, %1, %c0_i32_0 : i32
    scf.if %2 {
      %cst_11 = arith.constant 0.000000e+00 : f32
      %15 = vector.broadcast %cst_11 : f32 to vector<8x128xf32>
      %c0_12 = arith.constant 0 : index
      %c0_13 = arith.constant 0 : index
      %16 = vector.load %arg6[%c0_12, %c0_13] : memref<8x128xf32, #tpu.memory_space<vmem>>, vector<8x128xf32>
      tpu.vector_store %arg6[%c0_12, %c0_13], %15 {strides = array<i32>} : memref<8x128xf32, #tpu.memory_space<vmem>>, vector<8x128xf32>,
    } else {
    }
    %c0 = arith.constant 0 : index
    %c0_1 = arith.constant 0 : index
    %3 = vector.load %arg6[%c0, %c0_1] : memref<8x128xf32, #tpu.memory_space<vmem>>, vector<8x128xf32>
    %c0_2 = arith.constant 0 : index
    %c0_3 = arith.constant 0 : index
    %4 = vector.load %arg3[%c0_2, %c0_3] : memref<8x128xbf16, #tpu.memory_space<vmem>>, vector<8x128xbf16>
    %c0_4 = arith.constant 0 : index
    %c0_5 = arith.constant 0 : index
    %5 = vector.load %arg4[%c0_4, %c0_5] : memref<128x128xbf16, #tpu.memory_space<vmem>>, vector<128x128xbf16>
    %cst = arith.constant dense<0.000000e+00> : vector<8x128xf32>
    %6 = tpu.matmul %4, %5, %cst {dimension_numbers = #tpu.dot_dimension_numbers<[1], [0], [0], [1], [0, 0, 1, 1], [], []>} : vector<8x128xbf16>, vector<128x128xbf16>, vector<8x128xf32> -> vector<8x128xf32>
    %7 = arith.addf %3, %6 : vector<8x128xf32>
    %c0_6 = arith.constant 0 : index
    %c0_7 = arith.constant 0 : index
    %8 = vector.load %arg6[%c0_6, %c0_7] : memref<8x128xf32, #tpu.memory_space<vmem>>, vector<8x128xf32>
    tpu.vector_store %arg6[%c0_6, %c0_7], %7 {strides = array<i32>} : memref<8x128xf32, #tpu.memory_space<vmem>>, vector<8x128xf32>,
    %9 = arith.cmpi eq, %arg2, %arg1 : i32
    %10 = arith.extui %9 : i1 to i32
    %c0_i32_8 = arith.constant 0 : i32
    %11 = arith.cmpi ne, %10, %c0_i32_8 : i32
    scf.if %11 {
      %c0_11 = arith.constant 0 : index
      %c0_12 = arith.constant 0 : index
      %15 = vector.load %arg6[%c0_11, %c0_12] : memref<8x128xf32, #tpu.memory_space<vmem>>, vector<8x128xf32>
      %c0_13 = arith.constant 0 : index
      %c0_14 = arith.constant 0 : index
      %16 = vector.load %arg3[%c0_13, %c0_14] : memref<8x128xbf16, #tpu.memory_space<vmem>>, vector<8x128xbf16>
      %17 = arith.extf %16 : vector<8x128xbf16> to vector<8x128xf32>
      %18 = arith.addf %15, %17 : vector<8x128xf32>
      %c0_15 = arith.constant 0 : index
      %c0_16 = arith.constant 0 : index
      %19 = vector.load %arg6[%c0_15, %c0_16] : memref<8x128xf32, #tpu.memory_space<vmem>>, vector<8x128xf32>
      tpu.vector_store %arg6[%c0_15, %c0_16], %18 {strides = array<i32>} : memref<8x128xf32, #tpu.memory_space<vmem>>, vector<8x128xf32>,
    } else {
    }
    %c0_i32_9 = arith.constant 0 : i32
    %12 = arith.cmpi eq, %arg2, %c0_i32_9 : i32
    %13 = arith.extui %12 : i1 to i32
    %c0_i32_10 = arith.constant 0 : i32
    %14 = arith.cmpi ne, %13, %c0_i32_10 : i32
    scf.if %14 {
      %c0_11 = arith.constant 0 : index
      %c0_12 = arith.constant 0 : index
      %15 = vector.load %arg6[%c0_11, %c0_12] : memref<8x128xf32, #tpu.memory_space<vmem>>, vector<8x128xf32>
      %c0_13 = arith.constant 0 : index
      %c0_14 = arith.constant 0 : index
      %16 = vector.load %arg5[%c0_13, %c0_14] : memref<1x128xf32, #tpu.memory_space<vmem>>, vector<1x128xf32>
      %17 = vector.broadcast %16 : vector<1x128xf32> to vector<8x128xf32>
      %18 = arith.addf %15, %17 : vector<8x128xf32>
      %c0_15 = arith.constant 0 : index
      %c0_16 = arith.constant 0 : index
      %19 = vector.load %arg6[%c0_15, %c0_16] : memref<8x128xf32, #tpu.memory_space<vmem>>, vector<8x128xf32>
      tpu.vector_store %arg6[%c0_15, %c0_16], %18 {strides = array<i32>} : memref<8x128xf32, #tpu.memory_space<vmem>>, vector<8x128xf32>,
    } else {
    }
    return
  }
  func.func @transform_0(%arg0: i32, %arg1: i32, %arg2: i32) -> (i32, i32) {
    %c0_i32 = arith.constant 0 : i32
    return %arg0, %arg2 : i32, i32
  }
  func.func @transform_1(%arg0: i32, %arg1: i32, %arg2: i32) -> (i32, i32) {
    %c0_i32 = arith.constant 0 : i32
    return %arg2, %arg1 : i32, i32
  }
  func.func @transform_2(%arg0: i32, %arg1: i32, %arg2: i32) -> (i32, i32) {
    %c0_i32 = arith.constant 0 : i32
    %c0_i32_0 = arith.constant 0 : i32
    return %c0_i32, %arg1 : i32, i32
  }
  func.func @transform_3(%arg0: i32, %arg1: i32, %arg2: i32) -> (i32, i32) {
    %c0_i32 = arith.constant 0 : i32
    return %arg0, %arg1 : i32, i32
  }
}

</mosaic_0001>

<llo_original>
// kernel: residual_linear.1
$region0: #{residual_linear.1}
  #allocation0 [shape = 'u32[]', space=smem, size = 0x4, offset = 0x4, fixed_abs, tag = 'smem constant byte address 0x4 - core index']
  #allocation1 [shape = 'u32[144,128]{1,0:T(1,128)}', space=vmem, size = 0x12000, scoped, tag = 'internal scratch']
  %s0 = inlined_call_operand.vmem [shape: bf16[16,128], index: 0, kind: input, shape index: {}]
  %s1 = inlined_call_operand.hbm [shape: bf16[128,128], index: 1, kind: input, shape index: {}]
  %s2 = inlined_call_operand.vmem [shape: f32[1,128], index: 2, kind: input, shape index: {}]
  %s3 = inlined_call_operand.vmem [shape: f32[16,128], index: 3, kind: output, shape index: {}]
  %s4 = sld [smem:[#allocation0]]
  $region61: #{residual_linear.1} parent=0
    _
  %s6 = ssub.s32 1, %s4
  %s7 = scalar_select 0, %s6, %s4
  $region1: #{residual_linear.1} parent=0
    #allocation2 [shape = 'u8[32768]{0}', space=vmem, size = 0x8000, scoped, tag = 'input window, operand 1, single buffered']
    #allocation3 [shape = 's32[2]{0}', space=sflag, size = 0x8, scoped, tag = 'scoped memory for residual_linear.1']
    %8 = vsyncpa [#allocation3], 0
    loop: start=0, step=1, limit=4
    $region2: #{residual_linear.1} parent=1 // loop_pre_header
      _
    $region3: #{residual_linear.1} parent=1 // loop_header
      %s10 = sphi 0, %s14
      %p11 = scmp.ge.s32.totalorder %s10, 4
      %s17 = sphi 0, %s36
      %s18 = sphi 0, %s32
      %s19 = sphi 0, %s28
      %s20 = sphi 0, %s17
      %s21 = sphi 0, %s18
      %s22 = sphi 0, %s19
      %s23 = sphi 0, %s20
      %s24 = sphi 0, %s21
      %s25 = sphi 0, %s22
      %s41 = sphi 0, %s43
      %s44 = sphi 0, %s41
      %s45 = sphi 0, %s44
      %s61 = sphi 0, %s45
      %s69 = sphi 0, %s71
      %s72 = sphi 0, %s69
      %s73 = sphi 0, %s72
      %s89 = sphi 0, %s73
      %s95 = sphi 0, %s97
      %s98 = sphi 0, %s95
      %s99 = sphi 0, %s98
      %s115 = sphi 0, %s99
      %s123 = sphi 0, %s125
      %s126 = sphi 0, %s123
      %s127 = sphi 0, %s126
      %s143 = sphi 0, %s127
    $region4: #{residual_linear.1} parent=1 // loop_header_branch
      %13 = sbr.rel (%p11) target = $region8
    $region5: #{residual_linear.1} parent=1 // loop_body
      %s15 = ssub.s32 %s10, 1
      %s16 = ssub.s32 %s10, 2
      %s26 = sadd.s32 1, %s19
      %p27 = scmp.ge.s32.totalorder %s26, 1
      %s28 = scalar_select %p27, 0, %s26
      %s29 = sadd.s32 1, %s18
      %s30 = scalar_select %p27, %s29, %s18
      %p31 = scmp.ge.s32.totalorder %s30, 1
      %s32 = scalar_select %p31, 0, %s30
      %s33 = sadd.s32 1, %s17
      %s34 = scalar_select %p31, %s33, %s17
      %p35 = scmp.ge.s32.totalorder %s34, 2
      %s36 = scalar_select %p35, 0, %s34
      %s37 = ssub.s32 %s17, %s36
      %s38 = ssub.s32 %s19, %s28
      %s39 = sor.u32 %s37, %s38
      %p40 = scmp.eq.s32.totalorder %s39, 0
      %s42 = sadd.s32 %s41, 1
      %s43 = scalar_select %p40, %s41, %s42
      %p46 = pneg %p40
      %p47 = scmp.eq.s32.totalorder %s10, 1
      %p48 = por %p46, %p47
      %p49 = scmp.ne.s32.totalorder %s41, %s44
      %p50 = scmp.eq.s32.totalorder %s10, 0
      %p51 = por %p49, %p50
      %p52 = scmp.ne.s32.totalorder %s41, %s44
      %p53 = scmp.eq.s32.totalorder %s15, 1
      %p54 = por %p52, %p53
      %p55 = scmp.ne.s32.totalorder %s44, %s45
      %p56 = scmp.eq.s32.totalorder %s15, 0
      %p57 = por %p55, %p56
      %p58 = scmp.ne.s32.totalorder %s44, %s45
      %p59 = scmp.eq.s32.totalorder %s16, 1
      %p60 = por %p58, %p59
      %p62 = scmp.ne.s32.totalorder %s45, %s61
      %p63 = scmp.eq.s32.totalorder %s16, 0
      %p64 = por %p62, %p63
      %s65 = ssub.s32 %s19, %s28
      %s66 = ssub.s32 %s18, %s32
      %s67 = sor.u32 %s65, %s66
      %p68 = scmp.eq.s32.totalorder %s67, 0
      %s70 = sadd.s32 %s69, 1
      %s71 = scalar_select %p68, %s69, %s70
      %p74 = pneg %p68
      %p75 = scmp.eq.s32.totalorder %s10, 1
      %p76 = por %p74, %p75
      %p77 = scmp.ne.s32.totalorder %s69, %s72
      %p78 = scmp.eq.s32.totalorder %s10, 0
      %p79 = por %p77, %p78
      %p80 = scmp.ne.s32.totalorder %s69, %s72
      %p81 = scmp.eq.s32.totalorder %s15, 1
      %p82 = por %p80, %p81
      %p83 = scmp.ne.s32.totalorder %s72, %s73
      %p84 = scmp.eq.s32.totalorder %s15, 0
      %p85 = por %p83, %p84
      %p86 = scmp.ne.s32.totalorder %s72, %s73
      %p87 = scmp.eq.s32.totalorder %s16, 1
      %p88 = por %p86, %p87
      %p90 = scmp.ne.s32.totalorder %s73, %s89
      %p91 = scmp.eq.s32.totalorder %s16, 0
      %p92 = por %p90, %p91
      %s93 = ssub.s32 %s18, %s32
      %p94 = scmp.eq.s32.totalorder %s93, 0
      %s96 = sadd.s32 %s95, 1
      %s97 = scalar_select %p94, %s95, %s96
      %p100 = pneg %p94
      %p101 = scmp.eq.s32.totalorder %s10, 1
      %p102 = por %p100, %p101
      %p103 = scmp.ne.s32.totalorder %s95, %s98
      %p104 = scmp.eq.s32.totalorder %s10, 0
      %p105 = por %p103, %p104
      %p106 = scmp.ne.s32.totalorder %s95, %s98
      %p107 = scmp.eq.s32.totalorder %s15, 1
      %p108 = por %p106, %p107
      %p109 = scmp.ne.s32.totalorder %s98, %s99
      %p110 = scmp.eq.s32.totalorder %s15, 0
      %p111 = por %p109, %p110
      %p112 = scmp.ne.s32.totalorder %s98, %s99
      %p113 = scmp.eq.s32.totalorder %s16, 1
      %p114 = por %p112, %p113
      %p116 = scmp.ne.s32.totalorder %s99, %s115
      %p117 = scmp.eq.s32.totalorder %s16, 0
      %p118 = por %p116, %p117
      %s119 = ssub.s32 %s17, %s36
      %s120 = ssub.s32 %s18, %s32
      %s121 = sor.u32 %s119, %s120
      %p122 = scmp.eq.s32.totalorder %s121, 0
      %s124 = sadd.s32 %s123, 1
      %s125 = scalar_select %p122, %s123, %s124
      %p128 = pneg %p122
      %p129 = scmp.eq.s32.totalorder %s10, 1
      %p130 = por %p128, %p129
      %p131 = scmp.ne.s32.totalorder %s123, %s126
      %p132 = scmp.eq.s32.totalorder %s10, 0
      %p133 = por %p131, %p132
      %p134 = scmp.ne.s32.totalorder %s123, %s126
      %p135 = scmp.eq.s32.totalorder %s15, 1
      %p136 = por %p134, %p135
      %p137 = scmp.ne.s32.totalorder %s126, %s127
      %p138 = scmp.eq.s32.totalorder %s15, 0
      %p139 = por %p137, %p138
      %p140 = scmp.ne.s32.totalorder %s126, %s127
      %p141 = scmp.eq.s32.totalorder %s16, 1
      %p142 = por %p140, %p141
      %p144 = scmp.ne.s32.totalorder %s127, %s143
      %p145 = scmp.eq.s32.totalorder %s16, 0
      %p146 = por %p144, %p145
      %p147 = scmp.le.s32.totalorder 1, %s10
      %p148 = scmp.lt.s32.totalorder %s10, 3
      %p149 = pnand %p147, %p148
      %p150 = pneg %p149
      // Predicated region
      $region9: #{residual_linear.1} parent=5 // pred_check
        _
      $region10: #{residual_linear.1} parent=5 // pred_check_branch
        %152 = sbr.rel (%p149) target = $region12
      $region11: #{residual_linear.1} parent=5 // pred_region
        %s153 = ssub.s32 %s10, 1
        // Predicated region
        $region13: #{residual_linear.1} parent=11 // pred_check
          %p154 = pneg %p85
        $region14: #{residual_linear.1} parent=11 // pred_check_branch
          %156 = sbr.rel (%p154) target = $region16
        $region15: #{residual_linear.1} parent=11 // pred_region
          %s157 = smul.u32 16, %s22
          %s159 = ssub.s32 1024, 1024
          %160 = vsyncadd [#allocation3], %s159
          %s161 = sadd.s32 %s21, %s157
          %s162 = smul.addr %s161, 64
          %s163 = scalar_lea.hbm %s1, %s162
          %s164 = sshll.u32 [#allocation2], 4
          %s165 = int_to_ptr.vmem [resolvable:$true] %s164
          %170 = dma.hbm_to_vmem [thread:$0]  %s163, 1024, %s165, [#allocation3], 64, 64, 4
        $region16: #{residual_linear.1} parent=11 // pred_fallthru
          _
        // Predicated region
        $region17: #{residual_linear.1} parent=11 // pred_check
          %p171 = pneg %p111
        $region18: #{residual_linear.1} parent=11 // pred_check_branch
          %173 = sbr.rel (%p171) target = $region20
        $region19: #{residual_linear.1} parent=11 // pred_region
          %p174 = scmp.lt.s32.totalorder %s21, 0
          %s175 = scalar_select %p174, %s21, 0
          %s176 = scalar_lea.vmem %s2, %s175
        $region20: #{residual_linear.1} parent=11 // pred_fallthru
          _
      $region12: #{residual_linear.1} parent=5 // pred_fallthru
        _
      %p177 = scmp.lt.s32.totalorder %s10, 2
      // Predicated region
      $region21: #{residual_linear.1} parent=5 // pred_check
        %p178 = pneg %p177
      $region22: #{residual_linear.1} parent=5 // pred_check_branch
        %180 = sbr.rel (%p178) target = $region24
      $region23: #{residual_linear.1} parent=5 // pred_region
        // Predicated region
        $region25: #{residual_linear.1} parent=23 // pred_check
          %p181 = pneg %p51
        $region26: #{residual_linear.1} parent=23 // pred_check_branch
          %183 = sbr.rel (%p181) target = $region28
        $region27: #{residual_linear.1} parent=23 // pred_region
          %p184 = scmp.lt.s32.totalorder %s17, 1
          %s185 = scalar_select %p184, %s17, 1
          %p186 = scmp.lt.s32.totalorder %s19, 0
          %s187 = scalar_select %p186, %s19, 0
          %s188 = sadd.s32 %s187, %s185
          %s189 = smul.addr %s188, 4
          %s190 = scalar_lea.vmem %s0, %s189
        $region28: #{residual_linear.1} parent=23 // pred_fallthru
          _
      $region24: #{residual_linear.1} parent=5 // pred_fallthru
        _
      %p191 = scmp.le.s32.totalorder 1, %s10
      %p192 = scmp.lt.s32.totalorder %s10, 3
      %p193 = pnand %p191, %p192
      %p194 = pneg %p193
      // Predicated region
      $region29: #{residual_linear.1} parent=5 // pred_check
        _
      $region30: #{residual_linear.1} parent=5 // pred_check_branch
        %196 = sbr.rel (%p193) target = $region32
      $region31: #{residual_linear.1} parent=5 // pred_region
        %s197 = ssub.s32 %s10, 1
        // Predicated region
        $region33: #{residual_linear.1} parent=31 // pred_check
          %p198 = pneg %p85
        $region34: #{residual_linear.1} parent=31 // pred_check_branch
          %200 = sbr.rel (%p198) target = $region36
        $region35: #{residual_linear.1} parent=31 // pred_region
          %201 = dma.done [#allocation3], 1024
        $region36: #{residual_linear.1} parent=31 // pred_fallthru
          _
        %p202 = scmp.lt.s32.totalorder %s20, 1
        %s203 = scalar_select %p202, %s20, 1
        %p204 = scmp.lt.s32.totalorder %s22, 0
        %s205 = scalar_select %p204, %s22, 0
        %s206 = sadd.s32 %s205, %s203
        %s207 = smul.addr %s206, 4
        %s208 = scalar_lea.vmem %s0, %s207
        %p209 = pneg %p57
        %p210 = pneg %p54
        %p211 = pneg %p85
        %p212 = pneg %p82
        %p213 = scmp.lt.s32.totalorder %s21, 0
        %s214 = scalar_select %p213, %s21, 0
        %s215 = scalar_lea.vmem %s2, %s214
        %p216 = pneg %p111
        %p217 = pneg %p108
        %p218 = pneg %p139
        %p219 = pneg %p136
        %p220 = scmp.lt.s32.totalorder %s20, 1
        %s221 = scalar_select %p220, %s20, 1
        %p222 = scmp.lt.s32.totalorder %s21, 0
        %s223 = scalar_select %p222, %s21, 0
        %s224 = sadd.s32 %s223, %s221
        %s225 = smul.addr %s224, 8
        %s226 = scalar_lea.vmem %s3, %s225
        %p227 = scmp.lt.s32.totalorder %s20, 1
        %s228 = scalar_select %p227, %s20, 1
        %p229 = scmp.lt.s32.totalorder %s22, 0
        %s230 = scalar_select %p229, %s22, 0
        %s231 = sadd.s32 %s230, %s228
        %s232 = smul.addr %s231, 4
        %s233 = scalar_lea.vmem %s0, %s232
        %s234 = smul.u32 16, %s22
        %p235 = scmp.lt.s32.totalorder %s21, 0
        %s236 = scalar_select %p235, %s21, 0
        %s237 = scalar_lea.vmem %s2, %s236
        %p238 = scmp.lt.s32.totalorder %s20, 1
        %s239 = scalar_select %p238, %s20, 1
        %p240 = scmp.lt.s32.totalorder %s21, 0
        %s241 = scalar_select %p240, %s21, 0
        %s242 = sadd.s32 %s241, %s239
        %s243 = smul.addr %s242, 8
        %s244 = scalar_lea.vmem %s3, %s243
        %p246 = scmp.eq.s32.totalorder %s22, 0
        // Predicated region
        $region37: #{residual_linear.1} parent=31 // pred_check
          %p247 = pneg %p246
        $region38: #{residual_linear.1} parent=31 // pred_check_branch
          %249 = sbr.rel (%p247) target = $region40
        $region39: #{residual_linear.1} parent=31 // pred_region
          %250 = vst [vmem:[%s244] sm:$0xff] 0.0
        $region40: #{residual_linear.1} parent=31 // pred_fallthru
          _
        %v251 = vld [vmem:[%s244] sm:$0xff]
        %v252 = vld [vmem:[%s233] sm:$0xf]
        %v253 = vld [vmem:[#allocation2] sm:$0xf]
        %v254 = vld [vmem:[#allocation2 + $0x4] sm:$0xf]
        %v255 = vld [vmem:[#allocation2 + $0x8] sm:$0xf]
        %v256 = vld [vmem:[#allocation2 + $0xc] sm:$0xf]
        %v257 = vld [vmem:[#allocation2 + $0x10] sm:$0xf]
        %v258 = vld [vmem:[#allocation2 + $0x14] sm:$0xf]
        %v259 = vld [vmem:[#allocation2 + $0x18] sm:$0xf]
        %v260 = vld [vmem:[#allocation2 + $0x1c] sm:$0xf]
        %v261 = vld [vmem:[#allocation2 + $0x20] sm:$0xf]
        %v262 = vld [vmem:[#allocation2 + $0x24] sm:$0xf]
        %v263 = vld [vmem:[#allocation2 + $0x28] sm:$0xf]
        %v264 = vld [vmem:[#allocation2 + $0x2c] sm:$0xf]
        %v265 = vld [vmem:[#allocation2 + $0x30] sm:$0xf]
        %v266 = vld [vmem:[#allocation2 + $0x34] sm:$0xf]
        %v267 = vld [vmem:[#allocation2 + $0x38] sm:$0xf]
        %v268 = vld [vmem:[#allocation2 + $0x3c] sm:$0xf]
        %v285 = vunpack.c.l.b16 %v253
        %v286 = vunpack.c.l.b16 %v254
        %v287 = vunpack.c.l.b16 %v255
        %v288 = vunpack.c.l.b16 %v256
        %v289 = vunpack.c.l.b16 %v257
        %v290 = vunpack.c.l.b16 %v258
        %v291 = vunpack.c.l.b16 %v259
        %v292 = vunpack.c.l.b16 %v260
        %v293 = vunpack.c.l.b16 %v261
        %v294 = vunpack.c.l.b16 %v262
        %v295 = vunpack.c.l.b16 %v263
        %v296 = vunpack.c.l.b16 %v264
        %v297 = vunpack.c.l.b16 %v265
        %v298 = vunpack.c.l.b16 %v266
        %v299 = vunpack.c.l.b16 %v267
        %v300 = vunpack.c.l.b16 %v268
        %v301 = vpack.c.b16 %v286, %v285
        %v302 = vpack.c.b16 %v288, %v287
        %v303 = vpack.c.b16 %v290, %v289
        %v304 = vpack.c.b16 %v292, %v291
        %v305 = vpack.c.b16 %v294, %v293
        %v306 = vpack.c.b16 %v296, %v295
        %v307 = vpack.c.b16 %v298, %v297
        %v308 = vpack.c.b16 %v300, %v299
        %317 = vmatprep.subr.bf16.mxu0 0
        %318 = vmatpush1.bf16.msra.mxu0 %v301
        %319 = vmatprep.subr.bf16.mxu0 0
        %320 = vmatpush1.bf16.msra.mxu0 %v302
        %321 = vmatprep.subr.bf16.mxu0 0
        %322 = vmatpush1.bf16.msra.mxu0 %v303
        %323 = vmatprep.subr.bf16.mxu0 0
        %324 = vmatpush1.bf16.msra.mxu0 %v304
        %325 = vmatprep.subr.bf16.mxu0 0
        %326 = vmatpush1.bf16.msra.mxu0 %v305
        %327 = vmatprep.subr.bf16.mxu0 0
        %328 = vmatpush1.bf16.msra.mxu0 %v306
        %329 = vmatprep.subr.bf16.mxu0 0
        %330 = vmatpush1.bf16.msra.mxu0 %v307
        %331 = vmatprep.subr.bf16.mxu0 0
        %332 = vmatpush1.bf16.msra.mxu0 %v308
        %333 = vmatprep.subr.bf16.mxu0 0
        %334 = vmatpush1.bf16.msra.mxu0 0
        %335 = vmatprep.subr.bf16.mxu0 0
        %336 = vmatpush1.bf16.msra.mxu0 0
        %337 = vmatprep.subr.bf16.mxu0 0
        %338 = vmatpush1.bf16.msra.mxu0 0
        %339 = vmatprep.subr.bf16.mxu0 0
        %340 = vmatpush1.bf16.msra.mxu0 0
        %341 = vmatprep.subr.bf16.mxu0 0
        %342 = vmatpush1.bf16.msra.mxu0 0
        %343 = vmatprep.subr.bf16.mxu0 0
        %344 = vmatpush1.bf16.msra.mxu0 0
        %345 = vmatprep.subr.bf16.mxu0 0
        %346 = vmatpush1.bf16.msra.mxu0 0
        %347 = vmatprep.subr.bf16.mxu0 0
        %348 = vmatpush1.bf16.msra.mxu0 0
        %349 = vmatprep.mubr.bf16.mxu0 0
        %350 = vmatmul.mubr.bf16.gmra.mrb[0].mxu0 %v252
        %v351 = vpop.f32.mrb[0].mxu0
        %v352 = vadd.f32 0.0, %v351
        %v353 = vpop.f32.mrb[0].mxu0
        %v354 = vpop.f32.mrb[0].mxu0
        %v355 = vpop.f32.mrb[0].mxu0
        %356 = vdwg.mxu0
        %v357 = vadd.f32 %v251, %v352
        %358 = vst [vmem:[%s244] sm:$0xff] %v357
        %p359 = scmp.eq.s32.totalorder %s22, %s21
        // Predicated region
        $region41: #{residual_linear.1} parent=31 // pred_check
          %p360 = pneg %p359
        $region42: #{residual_linear.1} parent=31 // pred_check_branch
          %362 = sbr.rel (%p360) target = $region44
        $region43: #{residual_linear.1} parent=31 // pred_region
          %v363 = vld [vmem:[%s244] sm:$0xff]
          %v364 = vld [vmem:[%s233] sm:$0xf]
          %v365 = vunpack.c.l.bf16 %v364
          %v366 = vadd.f32 %v363, %v365
          %367 = vst [vmem:[%s244] sm:$0xff] %v366
        $region44: #{residual_linear.1} parent=31 // pred_fallthru
          _
        // Predicated region
        $region45: #{residual_linear.1} parent=31 // pred_check
          %p368 = pneg %p246
        $region46: #{residual_linear.1} parent=31 // pred_check_branch
          %370 = sbr.rel (%p368) target = $region48
        $region47: #{residual_linear.1} parent=31 // pred_region
          %v371 = vld [vmem:[%s244] sm:$0xff]
          %v372 = vld [vmem:[%s237] sm:$0x1]
          %v374 = vlaneseq
          %v375 = vshrl.u32 %v374, 7
          %v376 = vsub.s32 0, %v375
          %v377 = vrot.slane %v372, %v376
          %v379 = vadd.f32 %v371, %v377
          %380 = vst [vmem:[%s244] sm:$0xff] %v379
        $region48: #{residual_linear.1} parent=31 // pred_fallthru
          _
        %p381 = scmp.lt.s32.totalorder %s20, 1
        %s382 = scalar_select %p381, %s20, 1
        %p383 = scmp.lt.s32.totalorder %s21, 0
        %s384 = scalar_select %p383, %s21, 0
        %s385 = sadd.s32 %s384, %s382
        %s386 = smul.addr %s385, 8
        %s387 = scalar_lea.vmem %s3, %s386
        // Predicated region
        $region49: #{residual_linear.1} parent=31 // pred_check
          %p388 = pneg %p136
        $region50: #{residual_linear.1} parent=31 // pred_check_branch
          %390 = sbr.rel (%p388) target = $region52
        $region51: #{residual_linear.1} parent=31 // pred_region
          _
        $region52: #{residual_linear.1} parent=31 // pred_fallthru
          _
      $region32: #{residual_linear.1} parent=5 // pred_fallthru
        _
      %p391 = scmp.le.s32.totalorder 2, %s10
      // Predicated region
      $region53: #{residual_linear.1} parent=5 // pred_check
        %p392 = pneg %p391
      $region54: #{residual_linear.1} parent=5 // pred_check_branch
        %394 = sbr.rel (%p392) target = $region56
      $region55: #{residual_linear.1} parent=5 // pred_region
        %s395 = ssub.s32 %s10, 2
        // Predicated region
        $region57: #{residual_linear.1} parent=55 // pred_check
          %p396 = pneg %p142
        $region58: #{residual_linear.1} parent=55 // pred_check_branch
          %398 = sbr.rel (%p396) target = $region60
        $region59: #{residual_linear.1} parent=55 // pred_region
          %p399 = scmp.lt.s32.totalorder %s23, 1
          %s400 = scalar_select %p399, %s23, 1
          %p401 = scmp.lt.s32.totalorder %s24, 0
          %s402 = scalar_select %p401, %s24, 0
          %s403 = sadd.s32 %s402, %s400
          %s404 = smul.addr %s403, 8
          %s405 = scalar_lea.vmem %s3, %s404
        $region60: #{residual_linear.1} parent=55 // pred_fallthru
          _
      $region56: #{residual_linear.1} parent=5 // pred_fallthru
        _
    $region6: #{residual_linear.1} parent=1 // loop_footer
      %s14 = sadd.s32 1, %s10
    $region7: #{residual_linear.1} parent=1 // loop_footer_branch
      %9 = sbr.rel target = $region3
    $region8: #{residual_linear.1} parent=1 // loop_exit
      _
    %406 = vsyncpa [#allocation3], 1
    %s407 = scalar_lea.sflag [#allocation3], 1
    %408 = vsyncpa %s407, 1

</llo_original>
